<compile_context>
chip_gen: v6e
topology: v6e:2x2x1
jax: 0.10.0
libtpu: 0.0.40
codegen_flags: <defaults>
</compile_context>

<pallas_src>
from functools import partial

import jax
import jax.numpy as jnp
from jax.experimental import pallas as pl
from jax.experimental.pallas import tpu as pltpu


def policy_kernel(x_ref, w1_ref, b1_ref, w234_ref, b234_ref, wh_ref, bh_ref,
                  out_ref, *, sz):
    x = x_ref[...]

    # x = relu(affine1(x))
    h = jnp.maximum(
        jnp.dot(x, w1_ref[...], preferred_element_type=jnp.float32) + b1_ref[...],
        0.0)

    # x = x + relu(affineK(x)) for K = 2, 3, 4  (static unroll)
    for i in range(3):
        h = h + jnp.maximum(
            jnp.dot(h, w234_ref[i], preferred_element_type=jnp.float32)
            + b234_ref[i],
            0.0)

    # Fused heads: columns [0:sz] = action logits, [sz] = value, [sz+1] =
    # constraint, columns >= sz+2 are exactly zero (zero-padded weights/bias).
    head = jnp.dot(h, wh_ref[...], preferred_element_type=jnp.float32) + bh_ref[...]

    # Masked, numerically-stable softmax over the first `sz` lanes only.
    col = jax.lax.broadcasted_iota(jnp.int32, head.shape, 1)
    act_mask = col < sz
    logits = jnp.where(act_mask, head, -jnp.inf)
    m = jnp.max(logits, axis=-1, keepdims=True)
    e = jnp.where(act_mask, jnp.exp(head - m), 0.0)
    probs = e / jnp.sum(e, axis=-1, keepdims=True)

    # Single lane-dense store: softmax in the action lanes, raw head elsewhere.
    out_ref[...] = jnp.where(act_mask, probs, head)


def constrained_policy_forward(x, params, *, batch_tile=256):
    """Runs the ConstrainedPolicy forward pass in a Pallas TPU kernel.

    Args:
      x: (batch, (episode_len-1)*sz) float32
      params: dict of weights/biases, weights stored as (in, out).
      batch_tile: rows per grid step (weights stay resident across steps).

    Returns:
      (action_prob (B, sz), state_value (B, 1), constraint_value (B, 1))
    """
    B, in_features = x.shape
    H = params["w1"].shape[1]
    sz = params["wa"].shape[1]

    # --- fuse the three heads into one lane-padded (H, pad_n) weight ---------
    pad_n = ((sz + 2 + 127) // 128) * 128
    wh = jnp.zeros((H, pad_n), jnp.float32)
    wh = (wh.at[:, :sz].set(params["wa"])
            .at[:, sz:sz + 1].set(params["wv"])
            .at[:, sz + 1:sz + 2].set(params["wc"]))
    bh = jnp.zeros((1, pad_n), jnp.float32)
    bh = (bh.at[:, :sz].set(params["ba"])
            .at[:, sz:sz + 1].set(params["bv"])
            .at[:, sz + 1:sz + 2].set(params["bc"]))

    # --- pack residual-layer weights into single arrays ----------------------
    w234 = jnp.stack([params["w2"], params["w3"], params["w4"]])   # (3, H, H)
    b234 = jnp.stack([params["b2"], params["b3"], params["b4"]])   # (3, 1, H)

    # --- batch tiling (grid over rows; weights resident) ---------------------
    bt = min(batch_tile, B)
    B_pad = ((B + bt - 1) // bt) * bt
    if B_pad != B:
        x = jnp.pad(x, ((0, B_pad - B), (0, 0)))
    grid = (B_pad // bt,)

    in_specs = [
        pl.BlockSpec((bt, in_features), lambda i: (i, 0)),       # x
        pl.BlockSpec((in_features, H), lambda i: (0, 0)),        # w1
        pl.BlockSpec((1, H), lambda i: (0, 0)),                  # b1
        pl.BlockSpec((3, H, H), lambda i: (0, 0, 0)),            # w2..w4
        pl.BlockSpec((3, 1, H), lambda i: (0, 0, 0)),            # b2..b4
        pl.BlockSpec((H, pad_n), lambda i: (0, 0)),              # fused head W
        pl.BlockSpec((1, pad_n), lambda i: (0, 0)),              # fused head b
    ]
    out_specs = pl.BlockSpec((bt, pad_n), lambda i: (i, 0))

    packed = pl.pallas_call(
        partial(policy_kernel, sz=sz),
        out_shape=jax.ShapeDtypeStruct((B_pad, pad_n), jnp.float32),
        grid=grid,
        in_specs=in_specs,
        out_specs=out_specs,
        compiler_params=pltpu.CompilerParams(
            dimension_semantics=("parallel",)),
    )(x, params["w1"], params["b1"], w234, b234, wh, bh)

    packed = packed[:B]
    action_prob = packed[:, :sz]
    state_value = packed[:, sz:sz + 1]
    constraint_value = packed[:, sz + 1:sz + 2]
    return action_prob, state_value, constraint_value


def init_params(key, in_features, hidden, sz):
    """Deterministic synthetic parameter init (PyTorch-shape equivalent)."""
    ks = jax.random.split(key, 14)

    def lin(kw, kb, fan_in, fan_out):
        # Kaiming-uniform-ish scale, stored as (in, out) for x @ W.
        bound = 1.0 / jnp.sqrt(jnp.asarray(fan_in, jnp.float32))
        w = jax.random.uniform(kw, (fan_in, fan_out), jnp.float32, -bound, bound)
        b = jax.random.uniform(kb, (1, fan_out), jnp.float32, -bound, bound)
        return w, b

    w1, b1 = lin(ks[0], ks[1], in_features, hidden)
    w2, b2 = lin(ks[2], ks[3], hidden, hidden)
    w3, b3 = lin(ks[4], ks[5], hidden, hidden)
    w4, b4 = lin(ks[6], ks[7], hidden, hidden)
    wa, ba = lin(ks[8], ks[9], hidden, sz)
    wv, bv = lin(ks[10], ks[11], hidden, 1)
    wc, bc = lin(ks[12], ks[13], hidden, 1)

    return {
        "w1": w1, "b1": b1, "w2": w2, "b2": b2,
        "w3": w3, "b3": b3, "w4": w4, "b4": b4,
        "wa": wa, "ba": ba, "wv": wv, "bv": bv, "wc": wc, "bc": bc,
        # lagrangian_mult is a scalar parameter unused in forward():
        "lagrangian_mult": jnp.float32(0.0),
    }


def reference_forward(x, p):
    """Plain-JAX reference mirroring the PyTorch forward (for sanity check)."""
    h = jax.nn.relu(x @ p["w1"] + p["b1"])
    h = h + jax.nn.relu(h @ p["w2"] + p["b2"])
    h = h + jax.nn.relu(h @ p["w3"] + p["b3"])
    h = h + jax.nn.relu(h @ p["w4"] + p["b4"])
    act = jax.nn.softmax(h @ p["wa"] + p["ba"], axis=-1)
    val = h @ p["wv"] + p["bv"]
    con = h @ p["wc"] + p["bc"]
    return act, val, con


if __name__ == "__main__":
    # PARAMS = {'episode_len': 5, 'hidden_size': 32}, sz = 8
    SZ = 8
    EPISODE_LEN = 5
    HIDDEN = 32
    BATCH = 8
    IN_FEATURES = (EPISODE_LEN - 1) * SZ  # 32

    key = jax.random.PRNGKey(0)
    k_x, k_p = jax.random.split(key)

    x = jax.random.normal(k_x, (BATCH, IN_FEATURES), jnp.float32)
    params = init_params(k_p, IN_FEATURES, HIDDEN, SZ)

    action_prob, state_value, constraint_value = jax.block_until_ready(
        constrained_policy_forward(x, params))

    # sanity checks against the pure-JAX reference
    ref_act, ref_val, ref_con = reference_forward(x, params)
    assert action_prob.shape == (BATCH, SZ)
    assert state_value.shape == (BATCH, 1)
    assert constraint_value.shape == (BATCH, 1)
    assert jnp.allclose(jnp.sum(action_prob, axis=-1), 1.0, atol=1e-5)
    assert jnp.allclose(action_prob, ref_act, atol=1e-5)
    assert jnp.allclose(state_value, ref_val, atol=1e-5)
    assert jnp.allclose(constraint_value, ref_con, atol=1e-5)

    print("KERNEL_OK")
</pallas_src>

<mosaic_0001>
module attributes {stable_mosaic.version = 11 : i64} {
  func.func @policy_kernel(%arg0: i32, %arg1: memref<8x32xf32, #tpu.memory_space<vmem>>, %arg2: memref<32x32xf32, #tpu.memory_space<vmem>>, %arg3: memref<1x32xf32, #tpu.memory_space<vmem>>, %arg4: memref<3x32x32xf32, #tpu.memory_space<vmem>>, %arg5: memref<3x1x32xf32, #tpu.memory_space<vmem>>, %arg6: memref<32x128xf32, #tpu.memory_space<vmem>>, %arg7: memref<1x128xf32, #tpu.memory_space<vmem>>, %arg8: memref<8x128xf32, #tpu.memory_space<vmem>>) attributes {dimension_semantics = [#tpu.dimension_semantics<parallel>], iteration_bounds = array<i64: 1>, scalar_prefetch = 0 : i64, scratch_operands = 0 : i64, tpu.core_type = #tpu.core_type<tc>, window_params = [{transform_indices = @transform_0, window_bounds = array<i64: 8, 32>}, {pipeline_mode = #tpu.pipeline_mode<synchronous>, transform_indices = @transform_1, window_bounds = array<i64: 32, 32>}, {pipeline_mode = #tpu.pipeline_mode<synchronous>, transform_indices = @transform_2, window_bounds = array<i64: 1, 32>}, {pipeline_mode = #tpu.pipeline_mode<synchronous>, transform_indices = @transform_3, window_bounds = array<i64: 3, 32, 32>}, {pipeline_mode = #tpu.pipeline_mode<synchronous>, transform_indices = @transform_4, window_bounds = array<i64: 3, 1, 32>}, {pipeline_mode = #tpu.pipeline_mode<synchronous>, transform_indices = @transform_5, window_bounds = array<i64: 32, 128>}, {pipeline_mode = #tpu.pipeline_mode<synchronous>, transform_indices = @transform_6, window_bounds = array<i64: 1, 128>}, {transform_indices = @transform_7, window_bounds = array<i64: 8, 128>}]} {
    %c0 = arith.constant 0 : index
    %c0_0 = arith.constant 0 : index
    %0 = vector.load %arg1[%c0, %c0_0] : memref<8x32xf32, #tpu.memory_space<vmem>>, vector<8x32xf32>
    %c0_1 = arith.constant 0 : index
    %c0_2 = arith.constant 0 : index
    %1 = vector.load %arg2[%c0_1, %c0_2] : memref<32x32xf32, #tpu.memory_space<vmem>>, vector<32x32xf32>
    %cst = arith.constant dense<0.000000e+00> : vector<8x32xf32>
    %2 = tpu.matmul %0, %1, %cst {dimension_numbers = #tpu.dot_dimension_numbers<[1], [0], [0], [1], [0, 0, 1, 1], [], []>} : vector<8x32xf32>, vector<32x32xf32>, vector<8x32xf32> -> vector<8x32xf32>
    %c0_3 = arith.constant 0 : index
    %c0_4 = arith.constant 0 : index
    %3 = vector.load %arg3[%c0_3, %c0_4] : memref<1x32xf32, #tpu.memory_space<vmem>>, vector<1x32xf32>
    %4 = vector.broadcast %3 : vector<1x32xf32> to vector<8x32xf32>
    %5 = arith.addf %2, %4 : vector<8x32xf32>
    %cst_5 = arith.constant 0.000000e+00 : f32
    %6 = vector.broadcast %cst_5 : f32 to vector<8x32xf32>
    %7 = arith.maximumf %5, %6 : vector<8x32xf32>
    %c0_6 = arith.constant 0 : index
    %c0_7 = arith.constant 0 : index
    %c0_8 = arith.constant 0 : index
    %8 = vector.load %arg4[%c0_6, %c0_7, %c0_8] : memref<3x32x32xf32, #tpu.memory_space<vmem>>, vector<1x32x32xf32>
    %9 = vector.shape_cast %8 : vector<1x32x32xf32> to vector<32x32xf32>
    %cst_9 = arith.constant dense<0.000000e+00> : vector<8x32xf32>
    %10 = tpu.matmul %7, %9, %cst_9 {dimension_numbers = #tpu.dot_dimension_numbers<[1], [0], [0], [1], [0, 0, 1, 1], [], []>} : vector<8x32xf32>, vector<32x32xf32>, vector<8x32xf32> -> vector<8x32xf32>
    %c0_10 = arith.constant 0 : index
    %c0_11 = arith.constant 0 : index
    %c0_12 = arith.constant 0 : index
    %11 = vector.load %arg5[%c0_10, %c0_11, %c0_12] : memref<3x1x32xf32, #tpu.memory_space<vmem>>, vector<1x1x32xf32>
    %12 = vector.shape_cast %11 : vector<1x1x32xf32> to vector<1x32xf32>
    %13 = vector.broadcast %12 : vector<1x32xf32> to vector<8x32xf32>
    %14 = arith.addf %10, %13 : vector<8x32xf32>
    %cst_13 = arith.constant 0.000000e+00 : f32
    %15 = vector.broadcast %cst_13 : f32 to vector<8x32xf32>
    %16 = arith.maximumf %14, %15 : vector<8x32xf32>
    %17 = arith.addf %7, %16 : vector<8x32xf32>
    %c1 = arith.constant 1 : index
    %c0_14 = arith.constant 0 : index
    %c0_15 = arith.constant 0 : index
    %18 = vector.load %arg4[%c1, %c0_14, %c0_15] : memref<3x32x32xf32, #tpu.memory_space<vmem>>, vector<1x32x32xf32>
    %19 = vector.shape_cast %18 : vector<1x32x32xf32> to vector<32x32xf32>
    %cst_16 = arith.constant dense<0.000000e+00> : vector<8x32xf32>
    %20 = tpu.matmul %17, %19, %cst_16 {dimension_numbers = #tpu.dot_dimension_numbers<[1], [0], [0], [1], [0, 0, 1, 1], [], []>} : vector<8x32xf32>, vector<32x32xf32>, vector<8x32xf32> -> vector<8x32xf32>
    %c1_17 = arith.constant 1 : index
    %c0_18 = arith.constant 0 : index
    %c0_19 = arith.constant 0 : index
    %21 = vector.load %arg5[%c1_17, %c0_18, %c0_19] : memref<3x1x32xf32, #tpu.memory_space<vmem>>, vector<1x1x32xf32>
    %22 = vector.shape_cast %21 : vector<1x1x32xf32> to vector<1x32xf32>
    %23 = vector.broadcast %22 : vector<1x32xf32> to vector<8x32xf32>
    %24 = arith.addf %20, %23 : vector<8x32xf32>
    %cst_20 = arith.constant 0.000000e+00 : f32
    %25 = vector.broadcast %cst_20 : f32 to vector<8x32xf32>
    %26 = arith.maximumf %24, %25 : vector<8x32xf32>
    %27 = arith.addf %17, %26 : vector<8x32xf32>
    %c2 = arith.constant 2 : index
    %c0_21 = arith.constant 0 : index
    %c0_22 = arith.constant 0 : index
    %28 = vector.load %arg4[%c2, %c0_21, %c0_22] : memref<3x32x32xf32, #tpu.memory_space<vmem>>, vector<1x32x32xf32>
    %29 = vector.shape_cast %28 : vector<1x32x32xf32> to vector<32x32xf32>
    %cst_23 = arith.constant dense<0.000000e+00> : vector<8x32xf32>
    %30 = tpu.matmul %27, %29, %cst_23 {dimension_numbers = #tpu.dot_dimension_numbers<[1], [0], [0], [1], [0, 0, 1, 1], [], []>} : vector<8x32xf32>, vector<32x32xf32>, vector<8x32xf32> -> vector<8x32xf32>
    %c2_24 = arith.constant 2 : index
    %c0_25 = arith.constant 0 : index
    %c0_26 = arith.constant 0 : index
    %31 = vector.load %arg5[%c2_24, %c0_25, %c0_26] : memref<3x1x32xf32, #tpu.memory_space<vmem>>, vector<1x1x32xf32>
    %32 = vector.shape_cast %31 : vector<1x1x32xf32> to vector<1x32xf32>
    %33 = vector.broadcast %32 : vector<1x32xf32> to vector<8x32xf32>
    %34 = arith.addf %30, %33 : vector<8x32xf32>
    %cst_27 = arith.constant 0.000000e+00 : f32
    %35 = vector.broadcast %cst_27 : f32 to vector<8x32xf32>
    %36 = arith.maximumf %34, %35 : vector<8x32xf32>
    %37 = arith.addf %27, %36 : vector<8x32xf32>
    %c0_28 = arith.constant 0 : index
    %c0_29 = arith.constant 0 : index
    %38 = vector.load %arg6[%c0_28, %c0_29] : memref<32x128xf32, #tpu.memory_space<vmem>>, vector<32x128xf32>
    %cst_30 = arith.constant dense<0.000000e+00> : vector<8x128xf32>
    %39 = tpu.matmul %37, %38, %cst_30 {dimension_numbers = #tpu.dot_dimension_numbers<[1], [0], [0], [1], [0, 0, 1, 1], [], []>} : vector<8x32xf32>, vector<32x128xf32>, vector<8x128xf32> -> vector<8x128xf32>
    %c0_31 = arith.constant 0 : index
    %c0_32 = arith.constant 0 : index
    %40 = vector.load %arg7[%c0_31, %c0_32] : memref<1x128xf32, #tpu.memory_space<vmem>>, vector<1x128xf32>
    %41 = vector.broadcast %40 : vector<1x128xf32> to vector<8x128xf32>
    %42 = arith.addf %39, %41 : vector<8x128xf32>
    %43 = tpu.iota {dimensions = array<i32: 1>} : vector<8x128xi32>
    %c8_i32 = arith.constant 8 : i32
    %44 = vector.broadcast %c8_i32 : i32 to vector<8x128xi32>
    %45 = arith.cmpi slt, %43, %44 : vector<8x128xi32>
    %cst_33 = arith.constant 0xFF800000 : f32
    %46 = vector.broadcast %cst_33 : f32 to vector<8x128xf32>
    %47 = arith.select %45, %42, %46 : vector<8x128xi1>, vector<8x128xf32>
    %cst_34 = arith.constant dense<0xFF800000> : vector<8xf32>
    %48 = vector.multi_reduction <maximumf>, %47, %cst_34 [1] : vector<8x128xf32> to vector<8xf32>
    %49 = vector.shape_cast %48 : vector<8xf32> to vector<8x1xf32>
    %50 = vector.broadcast %49 : vector<8x1xf32> to vector<8x128xf32>
    %51 = arith.subf %42, %50 : vector<8x128xf32>
    %52 = math.exp %51 : vector<8x128xf32>
    %cst_35 = arith.constant 0.000000e+00 : f32
    %53 = vector.broadcast %cst_35 : f32 to vector<8x128xf32>
    %54 = arith.select %45, %52, %53 : vector<8x128xi1>, vector<8x128xf32>
    %cst_36 = arith.constant dense<0.000000e+00> : vector<8xf32>
    %55 = vector.multi_reduction <add>, %54, %cst_36 [1] : vector<8x128xf32> to vector<8xf32>
    %56 = vector.shape_cast %55 : vector<8xf32> to vector<8x1xf32>
    %57 = vector.broadcast %56 : vector<8x1xf32> to vector<8x128xf32>
    %58 = arith.divf %54, %57 : vector<8x128xf32>
    %59 = arith.select %45, %58, %42 : vector<8x128xi1>, vector<8x128xf32>
    %c0_37 = arith.constant 0 : index
    %c0_38 = arith.constant 0 : index
    %60 = vector.load %arg8[%c0_37, %c0_38] : memref<8x128xf32, #tpu.memory_space<vmem>>, vector<8x128xf32>
    tpu.vector_store %arg8[%c0_37, %c0_38], %59 {strides = array<i32>} : memref<8x128xf32, #tpu.memory_space<vmem>>, vector<8x128xf32>,
    return
  }
  func.func @transform_0(%arg0: i32) -> (i32, i32) {
    %c0_i32 = arith.constant 0 : i32
    %c0_i32_0 = arith.constant 0 : i32
    return %arg0, %c0_i32 : i32, i32
  }
  func.func @transform_1(%arg0: i32) -> (i32, i32) {
    %c0_i32 = arith.constant 0 : i32
    %c0_i32_0 = arith.constant 0 : i32
    %c0_i32_1 = arith.constant 0 : i32
    return %c0_i32, %c0_i32_0 : i32, i32
  }
  func.func @transform_2(%arg0: i32) -> (i32, i32) {
    %c0_i32 = arith.constant 0 : i32
    %c0_i32_0 = arith.constant 0 : i32
    %c0_i32_1 = arith.constant 0 : i32
    return %c0_i32, %c0_i32_0 : i32, i32
  }
  func.func @transform_3(%arg0: i32) -> (i32, i32, i32) {
    %c0_i32 = arith.constant 0 : i32
    %c0_i32_0 = arith.constant 0 : i32
    %c0_i32_1 = arith.constant 0 : i32
    %c0_i32_2 = arith.constant 0 : i32
    return %c0_i32, %c0_i32_0, %c0_i32_1 : i32, i32, i32
  }
  func.func @transform_4(%arg0: i32) -> (i32, i32, i32) {
    %c0_i32 = arith.constant 0 : i32
    %c0_i32_0 = arith.constant 0 : i32
    %c0_i32_1 = arith.constant 0 : i32
    %c0_i32_2 = arith.constant 0 : i32
    return %c0_i32, %c0_i32_0, %c0_i32_1 : i32, i32, i32
  }
  func.func @transform_5(%arg0: i32) -> (i32, i32) {
    %c0_i32 = arith.constant 0 : i32
    %c0_i32_0 = arith.constant 0 : i32
    %c0_i32_1 = arith.constant 0 : i32
    return %c0_i32, %c0_i32_0 : i32, i32
  }
  func.func @transform_6(%arg0: i32) -> (i32, i32) {
    %c0_i32 = arith.constant 0 : i32
    %c0_i32_0 = arith.constant 0 : i32
    %c0_i32_1 = arith.constant 0 : i32
    return %c0_i32, %c0_i32_0 : i32, i32
  }
  func.func @transform_7(%arg0: i32) -> (i32, i32) {
    %c0_i32 = arith.constant 0 : i32
    %c0_i32_0 = arith.constant 0 : i32
    return %arg0, %c0_i32 : i32, i32
  }
}

</mosaic_0001>

<llo_original>
// kernel: tpu_custom_call.1
$region0: #{tpu_custom_call.1}
  #allocation0 [shape = 'u32[]', space=smem, size = 0x4, offset = 0x4, fixed_abs, tag = 'smem constant byte address 0x4 - core index']
  #allocation1 [shape = 'u32[144,128]{1,0:T(1,128)}', space=vmem, size = 0x12000, scoped, tag = 'internal scratch']
  %s0 = inlined_call_operand.hbm [shape: f32[8,32], index: 0, kind: input, shape index: {}]
  %s1 = inlined_call_operand.hbm [shape: f32[32,32], index: 1, kind: input, shape index: {}]
  %s2 = inlined_call_operand.vmem [shape: f32[1,32], index: 2, kind: input, shape index: {}]
  %s3 = inlined_call_operand.hbm [shape: f32[3,32,32], index: 3, kind: input, shape index: {}]
  %s4 = inlined_call_operand.vmem [shape: f32[3,1,32], index: 4, kind: input, shape index: {}]
  %s5 = inlined_call_operand.hbm [shape: f32[32,128], index: 5, kind: input, shape index: {}]
  %s6 = inlined_call_operand.vmem [shape: f32[1,128], index: 6, kind: input, shape index: {}]
  %s7 = inlined_call_operand.hbm [shape: f32[8,128], index: 7, kind: output, shape index: {}]
  %s8 = sld [smem:[#allocation0]]
  $region54: #{tpu_custom_call.1} parent=0
    _
  %s10 = ssub.s32 1, %s8
  %s11 = scalar_select 0, %s10, %s8
  $region1: #{tpu_custom_call.1} parent=0
    #allocation2 [shape = 'u8[4096]{0}', space=vmem, size = 0x1000, scoped, tag = 'input window, operand 0, single buffered']
    #allocation3 [shape = 's32[1]{0}', space=sflag, size = 0x4, scoped, tag = 'scoped memory for tpu_custom_call.1']
    #allocation4 [shape = 's32[1]{0}', space=sflag, size = 0x4, scoped, tag = 'scoped memory for tpu_custom_call.1']
    #allocation5 [shape = 'u8[16384]{0}', space=vmem, size = 0x4000, scoped, tag = 'input window, operand 1, single buffered']
    #allocation6 [shape = 's32[1]{0}', space=sflag, size = 0x4, scoped, tag = 'scoped memory for tpu_custom_call.1']
    #allocation7 [shape = 'u8[49152]{0}', space=vmem, size = 0xc000, scoped, tag = 'input window, operand 3, single buffered']
    #allocation8 [shape = 'u8[16384]{0}', space=vmem, size = 0x4000, scoped, tag = 'input window, operand 5, single buffered']
    #allocation9 [shape = 's32[1]{0}', space=sflag, size = 0x4, scoped, tag = 'scoped memory for tpu_custom_call.1']
    #allocation10 [shape = 'u8[4096]{0}', space=vmem, size = 0x1000, scoped, tag = 'output window, operand 0, single buffered']
    %12 = vsyncpa [#allocation3], 0
    %13 = vsyncpa [#allocation6], 0
    %14 = vsyncpa [#allocation9], 0
    %15 = vsyncpa [#allocation4], 0
    // Predicated region
    $region2: #{tpu_custom_call.1} parent=1 // pred_check
      _
    $region3: #{tpu_custom_call.1} parent=1 // pred_check_branch
      %17 = sbr.rel (0) target = $region5
    $region4: #{tpu_custom_call.1} parent=1 // pred_region
      %s19 = ssub.s32 128, 128
      %20 = vsyncadd [#allocation3], %s19
      %s22 = sshll.u32 [#allocation2], 4
      %s23 = int_to_ptr.vmem [resolvable:$true] %s22
      %25 = dma.hbm_to_vmem [thread:$0]  %s0, 128, %s23, [#allocation3]
    $region5: #{tpu_custom_call.1} parent=1 // pred_fallthru
      _
    // Predicated region
    $region6: #{tpu_custom_call.1} parent=1 // pred_check
      _
    $region7: #{tpu_custom_call.1} parent=1 // pred_check_branch
      %27 = sbr.rel (0) target = $region9
    $region8: #{tpu_custom_call.1} parent=1 // pred_region
      %s29 = ssub.s32 512, 512
      %30 = vsyncadd [#allocation6], %s29
      %s31 = sshll.u32 [#allocation5], 4
      %s32 = int_to_ptr.vmem [resolvable:$true] %s31
      %37 = dma.hbm_to_vmem [thread:$0]  %s1, 512, %s32, [#allocation6], 128, 128, 8
    $region9: #{tpu_custom_call.1} parent=1 // pred_fallthru
      _
    // Predicated region
    $region10: #{tpu_custom_call.1} parent=1 // pred_check
      _
    $region11: #{tpu_custom_call.1} parent=1 // pred_check_branch
      %39 = sbr.rel (0) target = $region13
    $region12: #{tpu_custom_call.1} parent=1 // pred_region
      _
    $region13: #{tpu_custom_call.1} parent=1 // pred_fallthru
      _
    // Predicated region
    $region14: #{tpu_custom_call.1} parent=1 // pred_check
      _
    $region15: #{tpu_custom_call.1} parent=1 // pred_check_branch
      %41 = sbr.rel (0) target = $region17
    $region16: #{tpu_custom_call.1} parent=1 // pred_region
      %s43 = ssub.s32 1536, 1536
      %44 = vsyncadd [#allocation6], %s43
      %s45 = sshll.u32 [#allocation7], 4
      %s46 = int_to_ptr.vmem [resolvable:$true] %s45
      %51 = dma.hbm_to_vmem [thread:$0]  %s3, 1536, %s46, [#allocation6], 128, 128, 8
    $region17: #{tpu_custom_call.1} parent=1 // pred_fallthru
      _
    // Predicated region
    $region18: #{tpu_custom_call.1} parent=1 // pred_check
      _
    $region19: #{tpu_custom_call.1} parent=1 // pred_check_branch
      %53 = sbr.rel (0) target = $region21
    $region20: #{tpu_custom_call.1} parent=1 // pred_region
      _
    $region21: #{tpu_custom_call.1} parent=1 // pred_fallthru
      _
    // Predicated region
    $region22: #{tpu_custom_call.1} parent=1 // pred_check
      _
    $region23: #{tpu_custom_call.1} parent=1 // pred_check_branch
      %55 = sbr.rel (0) target = $region25
    $region24: #{tpu_custom_call.1} parent=1 // pred_region
      %s57 = ssub.s32 512, 512
      %58 = vsyncadd [#allocation9], %s57
      %s59 = sshll.u32 [#allocation8], 4
      %s60 = int_to_ptr.vmem [resolvable:$true] %s59
      %65 = dma.hbm_to_vmem [thread:$0]  %s5, 512, %s60, [#allocation9], 128, 128, 8
    $region25: #{tpu_custom_call.1} parent=1 // pred_fallthru
      _
    // Predicated region
    $region26: #{tpu_custom_call.1} parent=1 // pred_check
      _
    $region27: #{tpu_custom_call.1} parent=1 // pred_check_branch
      %67 = sbr.rel (0) target = $region29
    $region28: #{tpu_custom_call.1} parent=1 // pred_region
      _
    $region29: #{tpu_custom_call.1} parent=1 // pred_fallthru
      _
    // Predicated region
    $region30: #{tpu_custom_call.1} parent=1 // pred_check
      _
    $region31: #{tpu_custom_call.1} parent=1 // pred_check_branch
      %69 = sbr.rel (0) target = $region33
    $region32: #{tpu_custom_call.1} parent=1 // pred_region
      %70 = dma.done [#allocation3], 128
    $region33: #{tpu_custom_call.1} parent=1 // pred_fallthru
      _
    // Predicated region
    $region34: #{tpu_custom_call.1} parent=1 // pred_check
      _
    $region35: #{tpu_custom_call.1} parent=1 // pred_check_branch
      %72 = sbr.rel (0) target = $region37
    $region36: #{tpu_custom_call.1} parent=1 // pred_region
      %73 = dma.done [#allocation6], 512
    $region37: #{tpu_custom_call.1} parent=1 // pred_fallthru
      _
    // Predicated region
    $region38: #{tpu_custom_call.1} parent=1 // pred_check
      _
    $region39: #{tpu_custom_call.1} parent=1 // pred_check_branch
      %75 = sbr.rel (0) target = $region41
    $region40: #{tpu_custom_call.1} parent=1 // pred_region
      %76 = dma.done [#allocation6], 1536
    $region41: #{tpu_custom_call.1} parent=1 // pred_fallthru
      _
    // Predicated region
    $region42: #{tpu_custom_call.1} parent=1 // pred_check
      _
    $region43: #{tpu_custom_call.1} parent=1 // pred_check_branch
      %78 = sbr.rel (0) target = $region45
    $region44: #{tpu_custom_call.1} parent=1 // pred_region
      %79 = dma.done [#allocation9], 512
    $region45: #{tpu_custom_call.1} parent=1 // pred_fallthru
      _
    %v80 = vld [vmem:[#allocation2] sm:$0xff]
    %v81 = vld [vmem:[#allocation5] sm:$0xff]
    %v82 = vld [vmem:[#allocation5 + $0x8] sm:$0xff]
    %v83 = vld [vmem:[#allocation5 + $0x10] sm:$0xff]
    %v84 = vld [vmem:[#allocation5 + $0x18] sm:$0xff]
    %v85 = vld [vmem:[%s2] sm:$0x1]
    %v87 = vlaneseq
    %v88 = vshrl.u32 %v87, 7
    %v89 = vsub.s32 0, %v88
    %v90 = vrot.slane %v85, %v89
    %vm92 = vcmask 261120
    %v94 = vsel %vm92, %v80, 0
    %96 = vmatprep.subr.mxu0 0.0
    %97 = vmatpush1.msra.mxu0 0.0
    %98 = vmatprep.subr.mxu0 0.0
    %99 = vmatpush1.msra.mxu0 0.0
    %100 = vmatprep.subr.mxu0 0.0
    %101 = vmatpush1.msra.mxu0 0.0
    %102 = vmatprep.subr.mxu0 0.0
    %103 = vmatpush1.msra.mxu0 0.0
    %104 = vmatprep.subr.mxu0 0.0
    %105 = vmatpush1.msra.mxu0 0.0
    %106 = vmatprep.subr.mxu0 0.0
    %107 = vmatpush1.msra.mxu0 0.0
    %108 = vmatprep.subr.mxu0 0.0
    %109 = vmatpush1.msra.mxu0 0.0
    %110 = vmatprep.subr.mxu0 0.0
    %111 = vmatpush1.msra.mxu0 0.0
    %112 = vmatprep.subr.mxu0 0.0
    %113 = vmatpush1.msra.mxu0 0.0
    %114 = vmatprep.subr.mxu0 0.0
    %115 = vmatpush1.msra.mxu0 0.0
    %116 = vmatprep.subr.mxu0 0.0
    %117 = vmatpush1.msra.mxu0 0.0
    %118 = vmatprep.subr.mxu0 0.0
    %119 = vmatpush1.msra.mxu0 0.0
    %120 = vmatprep.subr.mxu0 0.0
    %121 = vmatpush1.msra.mxu0 %v84
    %122 = vmatprep.subr.mxu0 0.0
    %123 = vmatpush1.msra.mxu0 %v83
    %124 = vmatprep.subr.mxu0 0.0
    %125 = vmatpush1.msra.mxu0 %v82
    %126 = vmatprep.subr.mxu0 0.0
    %127 = vmatpush1.msra.mxu0 %v81
    %128 = vmatprep.subr.mxu0 0.0
    %129 = vmatpush2.msra.mxu0 0.0
    %130 = vmatprep.subr.mxu0 0.0
    %131 = vmatpush2.msra.mxu0 0.0
    %132 = vmatprep.subr.mxu0 0.0
    %133 = vmatpush2.msra.mxu0 0.0
    %134 = vmatprep.subr.mxu0 0.0
    %135 = vmatpush2.msra.mxu0 0.0
    %136 = vmatprep.subr.mxu0 0.0
    %137 = vmatpush2.msra.mxu0 0.0
    %138 = vmatprep.subr.mxu0 0.0
    %139 = vmatpush2.msra.mxu0 0.0
    %140 = vmatprep.subr.mxu0 0.0
    %141 = vmatpush2.msra.mxu0 0.0
    %142 = vmatprep.subr.mxu0 0.0
    %143 = vmatpush2.msra.mxu0 0.0
    %144 = vmatprep.subr.mxu0 0.0
    %145 = vmatpush2.msra.mxu0 0.0
    %146 = vmatprep.subr.mxu0 0.0
    %147 = vmatpush2.msra.mxu0 0.0
    %148 = vmatprep.subr.mxu0 0.0
    %149 = vmatpush2.msra.mxu0 0.0
    %150 = vmatprep.subr.mxu0 0.0
    %151 = vmatpush2.msra.mxu0 0.0
    %152 = vmatprep.subr.mxu0 0.0
    %153 = vmatpush2.msra.mxu0 0.0
    %154 = vmatprep.subr.mxu0 0.0
    %155 = vmatpush2.msra.mxu0 0.0
    %156 = vmatprep.subr.mxu0 0.0
    %157 = vmatpush2.msra.mxu0 0.0
    %158 = vmatprep.subr.mxu0 0.0
    %159 = vmatpush2.msra.mxu0 0.0
    %160 = vmatprep.mubr.f32.mxu0 0.0
    %161 = vmatmul.mubr.f32.gmra.mxu0 %v94
    %v162 = vpop.f32.mrf.mxu0
    %v163 = vadd.f32 %v90, %v162
    %v164 = vpop.f32.mrf.mxu0
    %165 = vdwg.mxu0
    %v166 = vmax.f32 %v163, 0.0
    %v167 = vld [vmem:[#allocation7] sm:$0xff]
    %v168 = vld [vmem:[#allocation7 + $0x8] sm:$0xff]
    %v169 = vld [vmem:[#allocation7 + $0x10] sm:$0xff]
    %v170 = vld [vmem:[#allocation7 + $0x18] sm:$0xff]
    %v171 = vld [vmem:[%s4] sm:$0x1]
    %v173 = vlaneseq
    %v174 = vshrl.u32 %v173, 7
    %v175 = vsub.s32 0, %v174
    %v176 = vrot.slane %v171, %v175
    %v179 = vsel %vm92, %v166, 0
    %181 = vmatprep.subr.mxu0 0.0
    %182 = vmatpush1.msra.mxu0 0.0
    %183 = vmatprep.subr.mxu0 0.0
    %184 = vmatpush1.msra.mxu0 0.0
    %185 = vmatprep.subr.mxu0 0.0
    %186 = vmatpush1.msra.mxu0 0.0
    %187 = vmatprep.subr.mxu0 0.0
    %188 = vmatpush1.msra.mxu0 0.0
    %189 = vmatprep.subr.mxu0 0.0
    %190 = vmatpush1.msra.mxu0 0.0
    %191 = vmatprep.subr.mxu0 0.0
    %192 = vmatpush1.msra.mxu0 0.0
    %193 = vmatprep.subr.mxu0 0.0
    %194 = vmatpush1.msra.mxu0 0.0
    %195 = vmatprep.subr.mxu0 0.0
    %196 = vmatpush1.msra.mxu0 0.0
    %197 = vmatprep.subr.mxu0 0.0
    %198 = vmatpush1.msra.mxu0 0.0
    %199 = vmatprep.subr.mxu0 0.0
    %200 = vmatpush1.msra.mxu0 0.0
    %201 = vmatprep.subr.mxu0 0.0
    %202 = vmatpush1.msra.mxu0 0.0
    %203 = vmatprep.subr.mxu0 0.0
    %204 = vmatpush1.msra.mxu0 0.0
    %205 = vmatprep.subr.mxu0 0.0
    %206 = vmatpush1.msra.mxu0 %v170
    %207 = vmatprep.subr.mxu0 0.0
    %208 = vmatpush1.msra.mxu0 %v169
    %209 = vmatprep.subr.mxu0 0.0
    %210 = vmatpush1.msra.mxu0 %v168
    %211 = vmatprep.subr.mxu0 0.0
    %212 = vmatpush1.msra.mxu0 %v167
    %213 = vmatprep.subr.mxu0 0.0
    %214 = vmatpush2.msra.mxu0 0.0
    %215 = vmatprep.subr.mxu0 0.0
    %216 = vmatpush2.msra.mxu0 0.0
    %217 = vmatprep.subr.mxu0 0.0
    %218 = vmatpush2.msra.mxu0 0.0
    %219 = vmatprep.subr.mxu0 0.0
    %220 = vmatpush2.msra.mxu0 0.0
    %221 = vmatprep.subr.mxu0 0.0
    %222 = vmatpush2.msra.mxu0 0.0
    %223 = vmatprep.subr.mxu0 0.0
    %224 = vmatpush2.msra.mxu0 0.0
    %225 = vmatprep.subr.mxu0 0.0
    %226 = vmatpush2.msra.mxu0 0.0
    %227 = vmatprep.subr.mxu0 0.0
    %228 = vmatpush2.msra.mxu0 0.0
    %229 = vmatprep.subr.mxu0 0.0
    %230 = vmatpush2.msra.mxu0 0.0
    %231 = vmatprep.subr.mxu0 0.0
    %232 = vmatpush2.msra.mxu0 0.0
    %233 = vmatprep.subr.mxu0 0.0
    %234 = vmatpush2.msra.mxu0 0.0
    %235 = vmatprep.subr.mxu0 0.0
    %236 = vmatpush2.msra.mxu0 0.0
    %237 = vmatprep.subr.mxu0 0.0
    %238 = vmatpush2.msra.mxu0 0.0
    %239 = vmatprep.subr.mxu0 0.0
    %240 = vmatpush2.msra.mxu0 0.0
    %241 = vmatprep.subr.mxu0 0.0
    %242 = vmatpush2.msra.mxu0 0.0
    %243 = vmatprep.subr.mxu0 0.0
    %244 = vmatpush2.msra.mxu0 0.0
    %245 = vmatprep.mubr.f32.mxu0 0.0
    %246 = vmatmul.mubr.f32.gmra.mxu0 %v179
    %v247 = vpop.f32.mrf.mxu0
    %v248 = vadd.f32 %v176, %v247
    %v249 = vpop.f32.mrf.mxu0
    %250 = vdwg.mxu0
    %v251 = vmax.f32 %v248, 0.0
    %v252 = vadd.f32 %v166, %v251
    %s253 = scalar_lea.vmem [#allocation7], 32
    %v254 = vld [vmem:[%s253] sm:$0xff]
    %v255 = vld [vmem:[%s253 + $0x8] sm:$0xff]
    %v256 = vld [vmem:[%s253 + $0x10] sm:$0xff]
    %v257 = vld [vmem:[%s253 + $0x18] sm:$0xff]
    %s258 = scalar_lea.vmem %s4, 1
    %v259 = vld [vmem:[%s258] sm:$0x1]
    %v261 = vlaneseq
    %v262 = vshrl.u32 %v261, 7
    %v263 = vsub.s32 0, %v262
    %v264 = vrot.slane %v259, %v263
    %v267 = vsel %vm92, %v252, 0
    %269 = vmatprep.subr.mxu0 0.0
    %270 = vmatpush1.msra.mxu0 0.0
    %271 = vmatprep.subr.mxu0 0.0
    %272 = vmatpush1.msra.mxu0 0.0
    %273 = vmatprep.subr.mxu0 0.0
    %274 = vmatpush1.msra.mxu0 0.0
    %275 = vmatprep.subr.mxu0 0.0
    %276 = vmatpush1.msra.mxu0 0.0
    %277 = vmatprep.subr.mxu0 0.0
    %278 = vmatpush1.msra.mxu0 0.0
    %279 = vmatprep.subr.mxu0 0.0
    %280 = vmatpush1.msra.mxu0 0.0
    %281 = vmatprep.subr.mxu0 0.0
    %282 = vmatpush1.msra.mxu0 0.0
    %283 = vmatprep.subr.mxu0 0.0
    %284 = vmatpush1.msra.mxu0 0.0
    %285 = vmatprep.subr.mxu0 0.0
    %286 = vmatpush1.msra.mxu0 0.0
    %287 = vmatprep.subr.mxu0 0.0
    %288 = vmatpush1.msra.mxu0 0.0
    %289 = vmatprep.subr.mxu0 0.0
    %290 = vmatpush1.msra.mxu0 0.0
    %291 = vmatprep.subr.mxu0 0.0
    %292 = vmatpush1.msra.mxu0 0.0
    %293 = vmatprep.subr.mxu0 0.0
    %294 = vmatpush1.msra.mxu0 %v257
    %295 = vmatprep.subr.mxu0 0.0
    %296 = vmatpush1.msra.mxu0 %v256
    %297 = vmatprep.subr.mxu0 0.0
    %298 = vmatpush1.msra.mxu0 %v255
    %299 = vmatprep.subr.mxu0 0.0
    %300 = vmatpush1.msra.mxu0 %v254
    %301 = vmatprep.subr.mxu0 0.0
    %302 = vmatpush2.msra.mxu0 0.0
    %303 = vmatprep.subr.mxu0 0.0
    %304 = vmatpush2.msra.mxu0 0.0
    %305 = vmatprep.subr.mxu0 0.0
    %306 = vmatpush2.msra.mxu0 0.0
    %307 = vmatprep.subr.mxu0 0.0
    %308 = vmatpush2.msra.mxu0 0.0
    %309 = vmatprep.subr.mxu0 0.0
    %310 = vmatpush2.msra.mxu0 0.0
    %311 = vmatprep.subr.mxu0 0.0
    %312 = vmatpush2.msra.mxu0 0.0
    %313 = vmatprep.subr.mxu0 0.0
    %314 = vmatpush2.msra.mxu0 0.0
    %315 = vmatprep.subr.mxu0 0.0
    %316 = vmatpush2.msra.mxu0 0.0
    %317 = vmatprep.subr.mxu0 0.0
    %318 = vmatpush2.msra.mxu0 0.0
    %319 = vmatprep.subr.mxu0 0.0
    %320 = vmatpush2.msra.mxu0 0.0
    %321 = vmatprep.subr.mxu0 0.0
    %322 = vmatpush2.msra.mxu0 0.0
    %323 = vmatprep.subr.mxu0 0.0
    %324 = vmatpush2.msra.mxu0 0.0
    %325 = vmatprep.subr.mxu0 0.0
    %326 = vmatpush2.msra.mxu0 0.0
    %327 = vmatprep.subr.mxu0 0.0
    %328 = vmatpush2.msra.mxu0 0.0
    %329 = vmatprep.subr.mxu0 0.0
    %330 = vmatpush2.msra.mxu0 0.0
    %331 = vmatprep.subr.mxu0 0.0
    %332 = vmatpush2.msra.mxu0 0.0
    %333 = vmatprep.mubr.f32.mxu0 0.0
    %334 = vmatmul.mubr.f32.gmra.mxu0 %v267
    %v335 = vpop.f32.mrf.mxu0
    %v336 = vadd.f32 %v264, %v335
    %v337 = vpop.f32.mrf.mxu0
    %338 = vdwg.mxu0
    %v339 = vmax.f32 %v336, 0.0
    %v340 = vadd.f32 %v252, %v339
    %s341 = scalar_lea.vmem [#allocation7], 64
    %v342 = vld [vmem:[%s341] sm:$0xff]
    %v343 = vld [vmem:[%s341 + $0x8] sm:$0xff]
    %v344 = vld [vmem:[%s341 + $0x10] sm:$0xff]
    %v345 = vld [vmem:[%s341 + $0x18] sm:$0xff]
    %s346 = scalar_lea.vmem %s4, 2
    %v347 = vld [vmem:[%s346] sm:$0x1]
    %v349 = vlaneseq
    %v350 = vshrl.u32 %v349, 7
    %v351 = vsub.s32 0, %v350
    %v352 = vrot.slane %v347, %v351
    %v355 = vsel %vm92, %v340, 0
    %357 = vmatprep.subr.mxu0 0.0
    %358 = vmatpush1.msra.mxu0 0.0
    %359 = vmatprep.subr.mxu0 0.0
    %360 = vmatpush1.msra.mxu0 0.0
    %361 = vmatprep.subr.mxu0 0.0
    %362 = vmatpush1.msra.mxu0 0.0
    %363 = vmatprep.subr.mxu0 0.0
    %364 = vmatpush1.msra.mxu0 0.0
    %365 = vmatprep.subr.mxu0 0.0
    %366 = vmatpush1.msra.mxu0 0.0
    %367 = vmatprep.subr.mxu0 0.0
    %368 = vmatpush1.msra.mxu0 0.0
    %369 = vmatprep.subr.mxu0 0.0
    %370 = vmatpush1.msra.mxu0 0.0
    %371 = vmatprep.subr.mxu0 0.0
    %372 = vmatpush1.msra.mxu0 0.0
    %373 = vmatprep.subr.mxu0 0.0
    %374 = vmatpush1.msra.mxu0 0.0
    %375 = vmatprep.subr.mxu0 0.0
    %376 = vmatpush1.msra.mxu0 0.0
    %377 = vmatprep.subr.mxu0 0.0
    %378 = vmatpush1.msra.mxu0 0.0
    %379 = vmatprep.subr.mxu0 0.0
    %380 = vmatpush1.msra.mxu0 0.0
    %381 = vmatprep.subr.mxu0 0.0
    %382 = vmatpush1.msra.mxu0 %v345
    %383 = vmatprep.subr.mxu0 0.0
    %384 = vmatpush1.msra.mxu0 %v344
    %385 = vmatprep.subr.mxu0 0.0
    %386 = vmatpush1.msra.mxu0 %v343
    %387 = vmatprep.subr.mxu0 0.0
    %388 = vmatpush1.msra.mxu0 %v342
    %389 = vmatprep.subr.mxu0 0.0
    %390 = vmatpush2.msra.mxu0 0.0
    %391 = vmatprep.subr.mxu0 0.0
    %392 = vmatpush2.msra.mxu0 0.0
    %393 = vmatprep.subr.mxu0 0.0
    %394 = vmatpush2.msra.mxu0 0.0
    %395 = vmatprep.subr.mxu0 0.0
    %396 = vmatpush2.msra.mxu0 0.0
    %397 = vmatprep.subr.mxu0 0.0
    %398 = vmatpush2.msra.mxu0 0.0
    %399 = vmatprep.subr.mxu0 0.0
    %400 = vmatpush2.msra.mxu0 0.0
    %401 = vmatprep.subr.mxu0 0.0
    %402 = vmatpush2.msra.mxu0 0.0
    %403 = vmatprep.subr.mxu0 0.0
    %404 = vmatpush2.msra.mxu0 0.0
    %405 = vmatprep.subr.mxu0 0.0
    %406 = vmatpush2.msra.mxu0 0.0
    %407 = vmatprep.subr.mxu0 0.0
    %408 = vmatpush2.msra.mxu0 0.0
    %409 = vmatprep.subr.mxu0 0.0
    %410 = vmatpush2.msra.mxu0 0.0
    %411 = vmatprep.subr.mxu0 0.0
    %412 = vmatpush2.msra.mxu0 0.0
    %413 = vmatprep.subr.mxu0 0.0
    %414 = vmatpush2.msra.mxu0 0.0
    %415 = vmatprep.subr.mxu0 0.0
    %416 = vmatpush2.msra.mxu0 0.0
    %417 = vmatprep.subr.mxu0 0.0
    %418 = vmatpush2.msra.mxu0 0.0
    %419 = vmatprep.subr.mxu0 0.0
    %420 = vmatpush2.msra.mxu0 0.0
    %421 = vmatprep.mubr.f32.mxu0 0.0
    %422 = vmatmul.mubr.f32.gmra.mxu0 %v355
    %v423 = vpop.f32.mrf.mxu0
    %v424 = vadd.f32 %v352, %v423
    %v425 = vpop.f32.mrf.mxu0
    %426 = vdwg.mxu0
    %v427 = vmax.f32 %v424, 0.0
    %v428 = vadd.f32 %v340, %v427
    %v429 = vld [vmem:[#allocation8] sm:$0xff]
    %v430 = vld [vmem:[#allocation8 + $0x8] sm:$0xff]
    %v431 = vld [vmem:[#allocation8 + $0x10] sm:$0xff]
    %v432 = vld [vmem:[#allocation8 + $0x18] sm:$0xff]
    %v433 = vld [vmem:[%s6] sm:$0x1]
    %v435 = vlaneseq
    %v436 = vshrl.u32 %v435, 7
    %v437 = vsub.s32 0, %v436
    %v438 = vrot.slane %v433, %v437
    %v441 = vsel %vm92, %v428, 0
    %443 = vmatprep.subr.mxu0 0.0
    %444 = vmatpush1.msra.mxu0 0.0
    %445 = vmatprep.subr.mxu0 0.0
    %446 = vmatpush1.msra.mxu0 0.0
    %447 = vmatprep.subr.mxu0 0.0
    %448 = vmatpush1.msra.mxu0 0.0
    %449 = vmatprep.subr.mxu0 0.0
    %450 = vmatpush1.msra.mxu0 0.0
    %451 = vmatprep.subr.mxu0 0.0
    %452 = vmatpush1.msra.mxu0 0.0
    %453 = vmatprep.subr.mxu0 0.0
    %454 = vmatpush1.msra.mxu0 0.0
    %455 = vmatprep.subr.mxu0 0.0
    %456 = vmatpush1.msra.mxu0 0.0
    %457 = vmatprep.subr.mxu0 0.0
    %458 = vmatpush1.msra.mxu0 0.0
    %459 = vmatprep.subr.mxu0 0.0
    %460 = vmatpush1.msra.mxu0 0.0
    %461 = vmatprep.subr.mxu0 0.0
    %462 = vmatpush1.msra.mxu0 0.0
    %463 = vmatprep.subr.mxu0 0.0
    %464 = vmatpush1.msra.mxu0 0.0
    %465 = vmatprep.subr.mxu0 0.0
    %466 = vmatpush1.msra.mxu0 0.0
    %467 = vmatprep.subr.mxu0 0.0
    %468 = vmatpush1.msra.mxu0 %v432
    %469 = vmatprep.subr.mxu0 0.0
    %470 = vmatpush1.msra.mxu0 %v431
    %471 = vmatprep.subr.mxu0 0.0
    %472 = vmatpush1.msra.mxu0 %v430
    %473 = vmatprep.subr.mxu0 0.0
    %474 = vmatpush1.msra.mxu0 %v429
    %475 = vmatprep.subr.mxu0 0.0
    %476 = vmatpush2.msra.mxu0 0.0
    %477 = vmatprep.subr.mxu0 0.0
    %478 = vmatpush2.msra.mxu0 0.0
    %479 = vmatprep.subr.mxu0 0.0
    %480 = vmatpush2.msra.mxu0 0.0
    %481 = vmatprep.subr.mxu0 0.0
    %482 = vmatpush2.msra.mxu0 0.0
    %483 = vmatprep.subr.mxu0 0.0
    %484 = vmatpush2.msra.mxu0 0.0
    %485 = vmatprep.subr.mxu0 0.0
    %486 = vmatpush2.msra.mxu0 0.0
    %487 = vmatprep.subr.mxu0 0.0
    %488 = vmatpush2.msra.mxu0 0.0
    %489 = vmatprep.subr.mxu0 0.0
    %490 = vmatpush2.msra.mxu0 0.0
    %491 = vmatprep.subr.mxu0 0.0
    %492 = vmatpush2.msra.mxu0 0.0
    %493 = vmatprep.subr.mxu0 0.0
    %494 = vmatpush2.msra.mxu0 0.0
    %495 = vmatprep.subr.mxu0 0.0
    %496 = vmatpush2.msra.mxu0 0.0
    %497 = vmatprep.subr.mxu0 0.0
    %498 = vmatpush2.msra.mxu0 0.0
    %499 = vmatprep.subr.mxu0 0.0
    %500 = vmatpush2.msra.mxu0 0.0
    %501 = vmatprep.subr.mxu0 0.0
    %502 = vmatpush2.msra.mxu0 0.0
    %503 = vmatprep.subr.mxu0 0.0
    %504 = vmatpush2.msra.mxu0 0.0
    %505 = vmatprep.subr.mxu0 0.0
    %506 = vmatpush2.msra.mxu0 0.0
    %507 = vmatprep.mubr.f32.mxu0 0.0
    %508 = vmatmul.mubr.f32.gmra.mxu0 %v441
    %v509 = vpop.f32.mrf.mxu0
    %v510 = vadd.f32 %v438, %v509
    %v511 = vpop.f32.mrf.mxu0
    %512 = vdwg.mxu0
    %v513 = vlaneseq
    %v514 = vand.u32 %v513, 127
    %vm515 = vcmp.lt.s32.totalorder %v514, 8
    %v516 = vsel %vm515, %v510, -inf
    %517 = vmax.xlane.f32.xlu0 %v516
    %v518 = vpop.xlane.xlu0 %517
    %v519 = vsub.f32 %v510, %v518
    %v520 = vmul.f32 %v519, 1.442695
    %v521 = vpow.pop %v520
    %v522 = vsel %vm515, %v521, 0.0
    %523 = vadd.xlane.f32.xlu0 %v522
    %v524 = vpop.xlane.xlu0 %523
    %v525 = vrcp.pop %v524
    %v526 = vmul.f32 %v522, %v525
    %v527 = vsel %vm515, %v526, %v510
    %528 = vst [vmem:[#allocation10] sm:$0xff] %v527
    // Predicated region
    $region46: #{tpu_custom_call.1} parent=1 // pred_check
      _
    $region47: #{tpu_custom_call.1} parent=1 // pred_check_branch
      %530 = sbr.rel (0) target = $region49
    $region48: #{tpu_custom_call.1} parent=1 // pred_region
      %s532 = ssub.s32 128, 128
      %533 = vsyncadd [#allocation4], %s532
      %s535 = sshll.u32 [#allocation10], 4
      %s536 = int_to_ptr.vmem [resolvable:$true] %s535
      %538 = dma.vmem_to_hbm [thread:$0]  %s536, 128, %s7, [#allocation4]
    $region49: #{tpu_custom_call.1} parent=1 // pred_fallthru
      _
    // Predicated region
    $region50: #{tpu_custom_call.1} parent=1 // pred_check
      _
    $region51: #{tpu_custom_call.1} parent=1 // pred_check_branch
      %540 = sbr.rel (0) target = $region53
    $region52: #{tpu_custom_call.1} parent=1 // pred_region
      %541 = dma.done [#allocation4], 128
    $region53: #{tpu_custom_call.1} parent=1 // pred_fallthru
      _
    %542 = vsyncpa [#allocation3], 1
    %543 = vsyncpa [#allocation6], 1
    %544 = vsyncpa [#allocation9], 1
    %545 = vsyncpa [#allocation4], 1

</llo_original>
